<compile_context>
chip_gen: v5e
topology: v5e:2x2
jax: 0.10.0
libtpu: 0.0.40
codegen_flags: <defaults>
</compile_context>

<pallas_src>
import functools

import jax
import jax.numpy as jnp
from jax import lax
from jax.experimental import pallas as pl
from jax.experimental.pallas import tpu as pltpu


def _round_up(x, m):
    return ((x + m - 1) // m) * m


_SQRT_2_OVER_PI = 0.7978845608028654
_INV_SQRT_2 = 0.7071067811865476


def _ffn_kernel(x_ref, gamma_ref, beta_ref, w1_ref, b1_ref, w2_ref, b2_ref,
                o_ref, xn_ref, acc_ref, *, eps, d_true, approximate_gelu):
    """One (row_tile, H_chunk) grid step of LN -> Linear -> GELU -> Linear."""
    k = pl.program_id(1)

    # --- first H-chunk for this row tile: LayerNorm + accumulator init ---
    @pl.when(k == 0)
    def _():
        x = x_ref[...].astype(jnp.float32)               # (tm, Dp), f32 stats
        d_pad = x.shape[-1]
        inv_d = 1.0 / d_true
        mean = jnp.sum(x, axis=-1, keepdims=True) * inv_d
        xc = x - mean
        # Padded columns of x are zero, so each contributes (-mean)^2 to
        # sum(xc^2); subtract that so the variance is over the true D only.
        var = (jnp.sum(xc * xc, axis=-1, keepdims=True)
               - (d_pad - d_true) * mean * mean) * inv_d
        inv = lax.rsqrt(var + eps)
        # gamma/beta are zero-padded -> padded columns of xn become exactly 0.
        xn = xc * inv * gamma_ref[...] + beta_ref[...]
        xn_ref[...] = xn.astype(xn_ref.dtype)            # MXU operand
        acc_ref[...] = jnp.zeros_like(acc_ref)

    # --- Linear 1 chunk: (tm, Dp) @ (Dp, th), f32 accumulation ---
    h = jnp.dot(xn_ref[...], w1_ref[...], preferred_element_type=jnp.float32)
    h = h + b1_ref[...]

    # --- GELU: tanh approximation (EUP) by default; exact erf optional ---
    if approximate_gelu:
        h = 0.5 * h * (1.0 + jnp.tanh(_SQRT_2_OVER_PI
                                      * (h + 0.044715 * h * h * h)))
    else:
        h = 0.5 * h * (1.0 + lax.erf(h * _INV_SQRT_2))

    # --- Dropout(p=0) is identity.  Linear 2 chunk accumulates in f32 ---
    acc_ref[...] += jnp.dot(h.astype(w2_ref.dtype), w2_ref[...],
                            preferred_element_type=jnp.float32)

    # --- last H-chunk: add bias, write lane-dense output tile ---
    @pl.when(k == pl.num_programs(1) - 1)
    def _():
        o_ref[...] = (acc_ref[...] + b2_ref[...]).astype(o_ref.dtype)


def _pad2d(a, rows, cols, dtype=None):
    """Pad/cast only when needed (skip no-op HBM copies)."""
    if dtype is not None and a.dtype != dtype:
        a = a.astype(dtype)
    r, c = a.shape
    if r != rows or c != cols:
        a = jnp.pad(a, ((0, rows - r), (0, cols - c)))
    return a


def attention_feedforward(x, gamma, beta, w1, b1, w2, b2, *, eps=1e-5,
                          row_tile=None, hidden_tile=None,
                          compute_dtype=jnp.bfloat16, approximate_gelu=True):
    """Fused LayerNorm + MLP.  x: (B, N, D) -> (B, N, D).

    Weights use JAX convention: w1 (D, H), w2 (H, D) — transposed relative to
    torch.nn.Linear's (out, in) storage.  row_tile / hidden_tile default to an
    auto, generation-aware selection (weight-resident when VMEM allows).
    """
    B, N, D = x.shape
    H = w1.shape[1]
    M = B * N

    Dp = _round_up(D, 128)          # lane-dense embedding dim
    Hp0 = _round_up(H, 128)         # lane-dense hidden dim
    M16 = _round_up(M, 16)          # bf16 sublane packing needs >= 16 rows

    cbytes = jnp.dtype(compute_dtype).itemsize
    xbytes = jnp.dtype(x.dtype).itemsize
    obytes = xbytes

    # --- generation-aware VMEM budget / megacore heuristics -----------------
    try:
        vmem_cap = int(getattr(pltpu.get_tpu_info(), "vmem_capacity_bytes",
                               128 * 1024 * 1024))
    except Exception:               # not queryable -> be conservative
        vmem_cap = 64 * 1024 * 1024
    small_vmem = vmem_cap <= 80 * 1024 * 1024     # v7x-like: 64 MiB, 2 TCs/chip
    budget = (56 if small_vmem else 100) * 1024 * 1024

    def _fits(tm_, th_):
        nbuf = 2 if th_ >= Hp0 else 3             # streamed weights: Buffered(3)
        wbytes = nbuf * 2 * Dp * th_ * cbytes     # W1 + W2 chunk buffers
        act = (2 * tm_ * Dp * xbytes              # x tiles (double-buffered)
               + 2 * tm_ * Dp * obytes            # output tiles
               + tm_ * Dp * (cbytes + 4)          # xn + acc scratch
               + 4 * tm_ * th_ * 4                # hidden/GELU intermediates
               + 2 * (th_ + 3 * Dp) * 4           # b1 chunk, gamma, beta, b2
               + (1 << 20))                       # slack
        return wbytes + act <= budget

    def _pick_row_tile(want):
        want = max(16, min(int(want), M16))
        if want >= M16:
            return M16                            # single row tile, no row pad
        gi_ = pl.cdiv(M16, want)                  # choose #tiles, then size the
        gran = 128 if M16 >= 128 else 16          # tile -> minimal padded rows
        return min(_round_up(pl.cdiv(M16, gi_), gran), M16)

    if row_tile is None:
        want = 512 if small_vmem else 1024        # roofline-driven targets
        if small_vmem and M16 >= 256:             # keep both v7x TCs busy
            want = min(want, pl.cdiv(M16, 2))
        tm = _pick_row_tile(want)
    else:
        want = max(int(row_tile), 16)
        tm = min(_round_up(want, 16), M16)

    if hidden_tile is None:
        th = Hp0                                  # try weight-resident first
    else:
        th = min(_round_up(max(int(hidden_tile), 128), 128), Hp0)

    if row_tile is None:                          # shrink tm until it fits VMEM
        while tm > 128 and not _fits(tm, th):
            tm = _pick_row_tile(tm // 2)

    if hidden_tile is None and not _fits(tm, th):
        th = min(512, Hp0)                        # fall back to streaming W1/W2
        if row_tile is None:
            tm = _pick_row_tile(want)
            while tm > 128 and not _fits(tm, th):
                tm = _pick_row_tile(tm // 2)

    gi = pl.cdiv(M16, tm)
    Mp = gi * tm
    gk = pl.cdiv(Hp0, th)
    Hp = gk * th
    streamed = gk > 1

    f32 = jnp.float32
    x2d = _pad2d(x.reshape(M, D), Mp, Dp)
    gamma2 = _pad2d(gamma.reshape(1, D), 1, Dp, f32)
    beta2 = _pad2d(beta.reshape(1, D), 1, Dp, f32)
    b1_2 = _pad2d(b1.reshape(1, H), 1, Hp, f32)
    b2_2 = _pad2d(b2.reshape(1, D), 1, Dp, f32)
    # For already-128-aligned ViT shapes these are no-ops; under jit with
    # constant weights the remaining pads/casts constant-fold.
    w1p = _pad2d(w1, Dp, Hp, compute_dtype)
    w2p = _pad2d(w2, Hp, Dp, compute_dtype)

    def _wspec(shape, index_map):
        # Deeper buffering only helps when weight chunks are re-streamed.
        if streamed and hasattr(pl, "Buffered"):
            try:
                return pl.BlockSpec(shape, index_map,
                                    pipeline_mode=pl.Buffered(3))
            except Exception:
                pass
        return pl.BlockSpec(shape, index_map)

    kernel = functools.partial(_ffn_kernel, eps=eps, d_true=D,
                               approximate_gelu=approximate_gelu)

    out2d = pl.pallas_call(
        kernel,
        out_shape=jax.ShapeDtypeStruct((Mp, Dp), x.dtype),
        grid_spec=pltpu.PrefetchScalarGridSpec(
            num_scalar_prefetch=0,
            grid=(gi, gk),
            in_specs=[
                pl.BlockSpec((tm, Dp), lambda i, k: (i, 0)),   # x row tile
                pl.BlockSpec((1, Dp), lambda i, k: (0, 0)),    # gamma
                pl.BlockSpec((1, Dp), lambda i, k: (0, 0)),    # beta
                _wspec((Dp, th), lambda i, k: (0, k)),         # W1 H-chunk
                pl.BlockSpec((1, th), lambda i, k: (0, k)),    # b1 H-chunk
                _wspec((th, Dp), lambda i, k: (k, 0)),         # W2 H-chunk
                pl.BlockSpec((1, Dp), lambda i, k: (0, 0)),    # b2
            ],
            out_specs=pl.BlockSpec((tm, Dp), lambda i, k: (i, 0)),
            scratch_shapes=[
                pltpu.VMEM((tm, Dp), compute_dtype),   # normalized x tile
                pltpu.VMEM((tm, Dp), jnp.float32),     # f32 output accumulator
            ],
        ),
        compiler_params=pltpu.CompilerParams(
            dimension_semantics=("parallel", "arbitrary"),
            vmem_limit_bytes=int(budget)),
    )(x2d, gamma2, beta2, w1p, b1_2, w2p, b2_2)

    return out2d[:M, :D].reshape(B, N, D)


def _reference(x, gamma, beta, w1, b1, w2, b2, eps=1e-5):
    """Pure-JAX f32 reference matching the PyTorch module (exact erf GELU)."""
    xf = x.astype(jnp.float32)
    mean = jnp.mean(xf, axis=-1, keepdims=True)
    var = jnp.mean((xf - mean) ** 2, axis=-1, keepdims=True)
    xn = (xf - mean) * lax.rsqrt(var + eps) * gamma + beta
    h = xn @ w1 + b1
    h = 0.5 * h * (1.0 + lax.erf(h * _INV_SQRT_2))
    return (h @ w2 + b2).astype(x.dtype)


def _make_inputs(key, B, N, D, H):
    kx, kw1, kb1, kw2, kb2 = jax.random.split(key, 5)
    x = jax.random.normal(kx, (B, N, D), dtype=jnp.float32)
    gamma = jnp.ones((D,), jnp.float32)
    beta = jnp.zeros((D,), jnp.float32)
    w1 = jax.random.normal(kw1, (D, H), jnp.float32) * (D ** -0.5)
    b1 = jax.random.normal(kb1, (H,), jnp.float32) * 0.1
    w2 = jax.random.normal(kw2, (H, D), jnp.float32) * (H ** -0.5)
    b2 = jax.random.normal(kb2, (D,), jnp.float32) * 0.1
    return x, gamma, beta, w1, b1, w2, b2


if __name__ == "__main__":
    key = jax.random.PRNGKey(0)
    k0, k1 = jax.random.split(key)

    # --- small shapes consistent with the module: embed=32, hidden=64 -------
    B, N, D, H = 2, 8, 32, 64
    args = _make_inputs(k0, B, N, D, H)
    ref = _reference(*args)

    # Fast path (auto tiling, weight-resident): bf16 MXU + tanh GELU.
    out_fast = attention_feedforward(*args)
    jax.block_until_ready(out_fast)
    assert out_fast.shape == (B, N, D)
    assert jnp.allclose(out_fast, ref, atol=1e-1, rtol=1e-1), \
        "fast (bf16 + tanh-GELU) path mismatch vs f32 reference"

    # Exact path: f32 operands + exact erf GELU matches module semantics.
    out_exact = attention_feedforward(*args, compute_dtype=jnp.float32,
                                      approximate_gelu=False)
    jax.block_until_ready(out_exact)
    assert jnp.allclose(out_exact, ref, atol=1e-5, rtol=1e-5), \
        "exact (f32 + erf) path mismatch vs reference"

    # --- force the streamed-weights / multi-row-tile path (gi=2, gk=4) ------
    B2, N2, D2, H2 = 2, 16, 128, 512
    args2 = _make_inputs(k1, B2, N2, D2, H2)
    ref2 = _reference(*args2)
    out_stream = attention_feedforward(*args2, compute_dtype=jnp.float32,
                                       approximate_gelu=False,
                                       row_tile=16, hidden_tile=128)
    jax.block_until_ready(out_stream)
    assert out_stream.shape == (B2, N2, D2)
    assert jnp.allclose(out_stream, ref2, atol=1e-4, rtol=1e-4), \
        "streamed-weight accumulator path mismatch vs reference"

    print("KERNEL_OK")
</pallas_src>

<mosaic_0001>
module attributes {stable_mosaic.version = 11 : i64} {
  func.func @_ffn_kernel(%arg0: i32, %arg1: i32, %arg2: memref<16x128xf32, #tpu.memory_space<vmem>>, %arg3: memref<1x128xf32, #tpu.memory_space<vmem>>, %arg4: memref<1x128xf32, #tpu.memory_space<vmem>>, %arg5: memref<128x128xbf16, #tpu.memory_space<vmem>>, %arg6: memref<1x128xf32, #tpu.memory_space<vmem>>, %arg7: memref<128x128xbf16, #tpu.memory_space<vmem>>, %arg8: memref<1x128xf32, #tpu.memory_space<vmem>>, %arg9: memref<16x128xf32, #tpu.memory_space<vmem>>, %arg10: memref<16x128xbf16, #tpu.memory_space<vmem>>, %arg11: memref<16x128xf32, #tpu.memory_space<vmem>>) attributes {dimension_semantics = [#tpu.dimension_semantics<parallel>, #tpu.dimension_semantics<arbitrary>], iteration_bounds = array<i64: 1, 1>, scalar_prefetch = 0 : i64, scratch_operands = 2 : i64, tpu.core_type = #tpu.core_type<tc>, window_params = [{transform_indices = @transform_0, window_bounds = array<i64: 16, 128>}, {pipeline_mode = #tpu.pipeline_mode<synchronous>, transform_indices = @transform_1, window_bounds = array<i64: 1, 128>}, {pipeline_mode = #tpu.pipeline_mode<synchronous>, transform_indices = @transform_2, window_bounds = array<i64: 1, 128>}, {transform_indices = @transform_3, window_bounds = array<i64: 128, 128>}, {transform_indices = @transform_4, window_bounds = array<i64: 1, 128>}, {transform_indices = @transform_5, window_bounds = array<i64: 128, 128>}, {pipeline_mode = #tpu.pipeline_mode<synchronous>, transform_indices = @transform_6, window_bounds = array<i64: 1, 128>}, {transform_indices = @transform_7, window_bounds = array<i64: 16, 128>}]} {
    %c0_i32 = arith.constant 0 : i32
    %0 = arith.cmpi eq, %arg1, %c0_i32 : i32
    %1 = arith.extui %0 : i1 to i32
    %c0_i32_0 = arith.constant 0 : i32
    %2 = arith.cmpi ne, %1, %c0_i32_0 : i32
    scf.if %2 {
      %c0_19 = arith.constant 0 : index
      %c0_20 = arith.constant 0 : index
      %31 = vector.load %arg2[%c0_19, %c0_20] : memref<16x128xf32, #tpu.memory_space<vmem>>, vector<16x128xf32>
      %cst_21 = arith.constant dense<0.000000e+00> : vector<16xf32>
      %32 = vector.multi_reduction <add>, %31, %cst_21 [1] : vector<16x128xf32> to vector<16xf32>
      %33 = vector.shape_cast %32 : vector<16xf32> to vector<16x1xf32>
      %cst_22 = arith.constant 3.125000e-02 : f32
      %34 = vector.broadcast %cst_22 : f32 to vector<16x1xf32>
      %35 = arith.mulf %33, %34 : vector<16x1xf32>
      %36 = vector.broadcast %35 : vector<16x1xf32> to vector<16x128xf32>
      %37 = arith.subf %31, %36 : vector<16x128xf32>
      %38 = arith.mulf %37, %37 : vector<16x128xf32>
      %cst_23 = arith.constant dense<0.000000e+00> : vector<16xf32>
      %39 = vector.multi_reduction <add>, %38, %cst_23 [1] : vector<16x128xf32> to vector<16xf32>
      %40 = vector.shape_cast %39 : vector<16xf32> to vector<16x1xf32>
      %cst_24 = arith.constant 9.600000e+01 : f32
      %41 = vector.broadcast %cst_24 : f32 to vector<16x1xf32>
      %42 = arith.mulf %41, %35 : vector<16x1xf32>
      %43 = arith.mulf %42, %35 : vector<16x1xf32>
      %44 = arith.subf %40, %43 : vector<16x1xf32>
      %cst_25 = arith.constant 3.125000e-02 : f32
      %45 = vector.broadcast %cst_25 : f32 to vector<16x1xf32>
      %46 = arith.mulf %44, %45 : vector<16x1xf32>
      %cst_26 = arith.constant 9.99999974E-6 : f32
      %47 = vector.broadcast %cst_26 : f32 to vector<16x1xf32>
      %48 = arith.addf %46, %47 : vector<16x1xf32>
      %49 = math.rsqrt %48 : vector<16x1xf32>
      %50 = vector.broadcast %49 : vector<16x1xf32> to vector<16x128xf32>
      %51 = arith.mulf %37, %50 : vector<16x128xf32>
      %c0_27 = arith.constant 0 : index
      %c0_28 = arith.constant 0 : index
      %52 = vector.load %arg3[%c0_27, %c0_28] : memref<1x128xf32, #tpu.memory_space<vmem>>, vector<1x128xf32>
      %53 = vector.broadcast %52 : vector<1x128xf32> to vector<16x128xf32>
      %54 = arith.mulf %51, %53 : vector<16x128xf32>
      %c0_29 = arith.constant 0 : index
      %c0_30 = arith.constant 0 : index
      %55 = vector.load %arg4[%c0_29, %c0_30] : memref<1x128xf32, #tpu.memory_space<vmem>>, vector<1x128xf32>
      %56 = vector.broadcast %55 : vector<1x128xf32> to vector<16x128xf32>
      %57 = arith.addf %54, %56 : vector<16x128xf32>
      %58 = arith.truncf %57 : vector<16x128xf32> to vector<16x128xbf16>
      %c0_31 = arith.constant 0 : index
      %c0_32 = arith.constant 0 : index
      %59 = vector.load %arg10[%c0_31, %c0_32] : memref<16x128xbf16, #tpu.memory_space<vmem>>, vector<16x128xbf16>
      tpu.vector_store %arg10[%c0_31, %c0_32], %58 {strides = array<i32>} : memref<16x128xbf16, #tpu.memory_space<vmem>>, vector<16x128xbf16>,
      %cst_33 = arith.constant 0.000000e+00 : f32
      %60 = vector.broadcast %cst_33 : f32 to vector<16x128xf32>
      %c0_34 = arith.constant 0 : index
      %c0_35 = arith.constant 0 : index
      %61 = vector.load %arg11[%c0_34, %c0_35] : memref<16x128xf32, #tpu.memory_space<vmem>>, vector<16x128xf32>
      tpu.vector_store %arg11[%c0_34, %c0_35], %60 {strides = array<i32>} : memref<16x128xf32, #tpu.memory_space<vmem>>, vector<16x128xf32>,
    } else {
    }
    %c0 = arith.constant 0 : index
    %c0_1 = arith.constant 0 : index
    %3 = vector.load %arg10[%c0, %c0_1] : memref<16x128xbf16, #tpu.memory_space<vmem>>, vector<16x128xbf16>
    %c0_2 = arith.constant 0 : index
    %c0_3 = arith.constant 0 : index
    %4 = vector.load %arg5[%c0_2, %c0_3] : memref<128x128xbf16, #tpu.memory_space<vmem>>, vector<128x128xbf16>
    %cst = arith.constant dense<0.000000e+00> : vector<16x128xf32>
    %5 = tpu.matmul %3, %4, %cst {dimension_numbers = #tpu.dot_dimension_numbers<[1], [0], [0], [1], [0, 0, 1, 1], [], []>} : vector<16x128xbf16>, vector<128x128xbf16>, vector<16x128xf32> -> vector<16x128xf32>
    %c0_4 = arith.constant 0 : index
    %c0_5 = arith.constant 0 : index
    %6 = vector.load %arg6[%c0_4, %c0_5] : memref<1x128xf32, #tpu.memory_space<vmem>>, vector<1x128xf32>
    %7 = vector.broadcast %6 : vector<1x128xf32> to vector<16x128xf32>
    %8 = arith.addf %5, %7 : vector<16x128xf32>
    %cst_6 = arith.constant 5.000000e-01 : f32
    %9 = vector.broadcast %cst_6 : f32 to vector<16x128xf32>
    %10 = arith.mulf %9, %8 : vector<16x128xf32>
    %cst_7 = arith.constant 4.471500e-02 : f32
    %11 = vector.broadcast %cst_7 : f32 to vector<16x128xf32>
    %12 = arith.mulf %11, %8 : vector<16x128xf32>
    %13 = arith.mulf %12, %8 : vector<16x128xf32>
    %14 = arith.mulf %13, %8 : vector<16x128xf32>
    %15 = arith.addf %8, %14 : vector<16x128xf32>
    %cst_8 = arith.constant 0.797884583 : f32
    %16 = vector.broadcast %cst_8 : f32 to vector<16x128xf32>
    %17 = arith.mulf %16, %15 : vector<16x128xf32>
    %18 = math.tanh %17 : vector<16x128xf32>
    %cst_9 = arith.constant 1.000000e+00 : f32
    %19 = vector.broadcast %cst_9 : f32 to vector<16x128xf32>
    %20 = arith.addf %19, %18 : vector<16x128xf32>
    %21 = arith.mulf %10, %20 : vector<16x128xf32>
    %c0_10 = arith.constant 0 : index
    %c0_11 = arith.constant 0 : index
    %22 = vector.load %arg11[%c0_10, %c0_11] : memref<16x128xf32, #tpu.memory_space<vmem>>, vector<16x128xf32>
    %23 = arith.truncf %21 : vector<16x128xf32> to vector<16x128xbf16>
    %c0_12 = arith.constant 0 : index
    %c0_13 = arith.constant 0 : index
    %24 = vector.load %arg7[%c0_12, %c0_13] : memref<128x128xbf16, #tpu.memory_space<vmem>>, vector<128x128xbf16>
    %cst_14 = arith.constant dense<0.000000e+00> : vector<16x128xf32>
    %25 = tpu.matmul %23, %24, %cst_14 {dimension_numbers = #tpu.dot_dimension_numbers<[1], [0], [0], [1], [0, 0, 1, 1], [], []>} : vector<16x128xbf16>, vector<128x128xbf16>, vector<16x128xf32> -> vector<16x128xf32>
    %26 = arith.addf %22, %25 : vector<16x128xf32>
    %c0_15 = arith.constant 0 : index
    %c0_16 = arith.constant 0 : index
    %27 = vector.load %arg11[%c0_15, %c0_16] : memref<16x128xf32, #tpu.memory_space<vmem>>, vector<16x128xf32>
    tpu.vector_store %arg11[%c0_15, %c0_16], %26 {strides = array<i32>} : memref<16x128xf32, #tpu.memory_space<vmem>>, vector<16x128xf32>,
    %c0_i32_17 = arith.constant 0 : i32
    %28 = arith.cmpi eq, %arg1, %c0_i32_17 : i32
    %29 = arith.extui %28 : i1 to i32
    %c0_i32_18 = arith.constant 0 : i32
    %30 = arith.cmpi ne, %29, %c0_i32_18 : i32
    scf.if %30 {
      %c0_19 = arith.constant 0 : index
      %c0_20 = arith.constant 0 : index
      %31 = vector.load %arg11[%c0_19, %c0_20] : memref<16x128xf32, #tpu.memory_space<vmem>>, vector<16x128xf32>
      %c0_21 = arith.constant 0 : index
      %c0_22 = arith.constant 0 : index
      %32 = vector.load %arg8[%c0_21, %c0_22] : memref<1x128xf32, #tpu.memory_space<vmem>>, vector<1x128xf32>
      %33 = vector.broadcast %32 : vector<1x128xf32> to vector<16x128xf32>
      %34 = arith.addf %31, %33 : vector<16x128xf32>
      %c0_23 = arith.constant 0 : index
      %c0_24 = arith.constant 0 : index
      %35 = vector.load %arg9[%c0_23, %c0_24] : memref<16x128xf32, #tpu.memory_space<vmem>>, vector<16x128xf32>
      tpu.vector_store %arg9[%c0_23, %c0_24], %34 {strides = array<i32>} : memref<16x128xf32, #tpu.memory_space<vmem>>, vector<16x128xf32>,
    } else {
    }
    return
  }
  func.func @transform_0(%arg0: i32, %arg1: i32) -> (i32, i32) {
    %c0_i32 = arith.constant 0 : i32
    %c0_i32_0 = arith.constant 0 : i32
    return %arg0, %c0_i32 : i32, i32
  }
  func.func @transform_1(%arg0: i32, %arg1: i32) -> (i32, i32) {
    %c0_i32 = arith.constant 0 : i32
    %c0_i32_0 = arith.constant 0 : i32
    %c0_i32_1 = arith.constant 0 : i32
    return %c0_i32, %c0_i32_0 : i32, i32
  }
  func.func @transform_2(%arg0: i32, %arg1: i32) -> (i32, i32) {
    %c0_i32 = arith.constant 0 : i32
    %c0_i32_0 = arith.constant 0 : i32
    %c0_i32_1 = arith.constant 0 : i32
    return %c0_i32, %c0_i32_0 : i32, i32
  }
  func.func @transform_3(%arg0: i32, %arg1: i32) -> (i32, i32) {
    %c0_i32 = arith.constant 0 : i32
    %c0_i32_0 = arith.constant 0 : i32
    return %c0_i32, %arg1 : i32, i32
  }
  func.func @transform_4(%arg0: i32, %arg1: i32) -> (i32, i32) {
    %c0_i32 = arith.constant 0 : i32
    %c0_i32_0 = arith.constant 0 : i32
    return %c0_i32, %arg1 : i32, i32
  }
  func.func @transform_5(%arg0: i32, %arg1: i32) -> (i32, i32) {
    %c0_i32 = arith.constant 0 : i32
    %c0_i32_0 = arith.constant 0 : i32
    return %arg1, %c0_i32 : i32, i32
  }
  func.func @transform_6(%arg0: i32, %arg1: i32) -> (i32, i32) {
    %c0_i32 = arith.constant 0 : i32
    %c0_i32_0 = arith.constant 0 : i32
    %c0_i32_1 = arith.constant 0 : i32
    return %c0_i32, %c0_i32_0 : i32, i32
  }
  func.func @transform_7(%arg0: i32, %arg1: i32) -> (i32, i32) {
    %c0_i32 = arith.constant 0 : i32
    %c0_i32_0 = arith.constant 0 : i32
    return %arg0, %c0_i32 : i32, i32
  }
}

</mosaic_0001>

<llo_original>
// kernel: tpu_custom_call.1
$region0: #{tpu_custom_call.1}
  #allocation0 [shape = 'u32[]', space=smem, size = 0x4, offset = 0x4, fixed_abs, tag = 'smem constant byte address 0x4 - core index']
  #allocation1 [shape = 'u32[72,128]{1,0:T(1,128)}', space=vmem, size = 0x9000, scoped, tag = 'internal scratch']
  #allocation2 [shape = 'bf16[16,128]{1,0:T(8,128)(2,1)}', space=vmem, size = 0x1000, scoped, tag = 'scratch operand']
  #allocation3 [shape = 'f32[16,128]{1,0:T(8,128)}', space=vmem, size = 0x2000, scoped, tag = 'scratch operand']
  %s0 = inlined_call_operand.hbm [shape: f32[16,128], index: 0, kind: input, shape index: {}]
  %s1 = inlined_call_operand.hbm [shape: f32[1,128], index: 1, kind: input, shape index: {}]
  %s2 = inlined_call_operand.vmem [shape: f32[1,128], index: 2, kind: input, shape index: {}]
  %s3 = inlined_call_operand.hbm [shape: bf16[128,128], index: 3, kind: input, shape index: {}]
  %s4 = inlined_call_operand.vmem [shape: f32[1,128], index: 4, kind: input, shape index: {}]
  %s5 = inlined_call_operand.hbm [shape: bf16[128,128], index: 5, kind: input, shape index: {}]
  %s6 = inlined_call_operand.vmem [shape: f32[1,128], index: 6, kind: input, shape index: {}]
  %s7 = inlined_call_operand.hbm [shape: f32[16,128], index: 7, kind: output, shape index: {}]
  %s8 = sld [smem:[#allocation0]]
  $region62: #{tpu_custom_call.1} parent=0
    _
  %s10 = ssub.s32 1, %s8
  %s11 = scalar_select 0, %s10, %s8
  $region1: #{tpu_custom_call.1} parent=0
    #allocation4 [shape = 'u8[8192]{0}', space=vmem, size = 0x2000, scoped, tag = 'input window, operand 0, single buffered']
    #allocation5 [shape = 's32[1]{0}', space=sflag, size = 0x4, scoped, tag = 'scoped memory for tpu_custom_call.1']
    #allocation6 [shape = 's32[1]{0}', space=sflag, size = 0x4, scoped, tag = 'scoped memory for tpu_custom_call.1']
    #allocation7 [shape = 'u8[512]{0}', space=vmem, size = 0x400, scoped, tag = 'input window, operand 1, single buffered']
    #allocation8 [shape = 's32[1]{0}', space=sflag, size = 0x4, scoped, tag = 'scoped memory for tpu_custom_call.1']
    #allocation9 [shape = 'u8[32768]{0}', space=vmem, size = 0x8000, scoped, tag = 'input window, operand 3, single buffered']
    #allocation10 [shape = 'u8[32768]{0}', space=vmem, size = 0x8000, scoped, tag = 'input window, operand 5, single buffered']
    #allocation11 [shape = 's32[1]{0}', space=sflag, size = 0x4, scoped, tag = 'scoped memory for tpu_custom_call.1']
    #allocation12 [shape = 'u8[8192]{0}', space=vmem, size = 0x2000, scoped, tag = 'output window, operand 0, single buffered']
    %12 = vsyncpa [#allocation5], 0
    %13 = vsyncpa [#allocation8], 0
    %14 = vsyncpa [#allocation11], 0
    %15 = vsyncpa [#allocation6], 0
    // Predicated region
    $region2: #{tpu_custom_call.1} parent=1 // pred_check
      _
    $region3: #{tpu_custom_call.1} parent=1 // pred_check_branch
      %17 = sbr.rel (0) target = $region5
    $region4: #{tpu_custom_call.1} parent=1 // pred_region
      %19 = vsyncadd [#allocation5], 0
      %s20 = sshll.u32 %s0, 4
      %s21 = int_to_ptr.hbm [resolvable:$true] %s20
      %s22 = sshll.u32 [#allocation4], 4
      %s23 = int_to_ptr.vmem [resolvable:$true] %s22
      %28 = dma.hbm_to_vmem [thread:$0]  %s21, 256, %s23, [#allocation5], 128, 128, 8
    $region5: #{tpu_custom_call.1} parent=1 // pred_fallthru
      _
    // Predicated region
    $region6: #{tpu_custom_call.1} parent=1 // pred_check
      _
    $region7: #{tpu_custom_call.1} parent=1 // pred_check_branch
      %30 = sbr.rel (0) target = $region9
    $region8: #{tpu_custom_call.1} parent=1 // pred_region
      %32 = vsyncadd [#allocation8], 0
      %s34 = sshll.u32 %s1, 4
      %s35 = int_to_ptr.hbm [resolvable:$true] %s34
      %s36 = sshll.u32 [#allocation7], 4
      %s37 = int_to_ptr.vmem [resolvable:$true] %s36
      %39 = dma.hbm_to_vmem [thread:$0]  %s35, 16, %s37, [#allocation8]
    $region9: #{tpu_custom_call.1} parent=1 // pred_fallthru
      _
    // Predicated region
    $region10: #{tpu_custom_call.1} parent=1 // pred_check
      _
    $region11: #{tpu_custom_call.1} parent=1 // pred_check_branch
      %41 = sbr.rel (0) target = $region13
    $region12: #{tpu_custom_call.1} parent=1 // pred_region
      _
    $region13: #{tpu_custom_call.1} parent=1 // pred_fallthru
      _
    // Predicated region
    $region14: #{tpu_custom_call.1} parent=1 // pred_check
      _
    $region15: #{tpu_custom_call.1} parent=1 // pred_check_branch
      %43 = sbr.rel (0) target = $region17
    $region16: #{tpu_custom_call.1} parent=1 // pred_region
      %45 = vsyncadd [#allocation8], 0
      %s46 = sshll.u32 %s3, 4
      %s47 = int_to_ptr.hbm [resolvable:$true] %s46
      %s48 = sshll.u32 [#allocation9], 4
      %s49 = int_to_ptr.vmem [resolvable:$true] %s48
      %54 = dma.hbm_to_vmem [thread:$0]  %s47, 1024, %s49, [#allocation8], 64, 64, 4
    $region17: #{tpu_custom_call.1} parent=1 // pred_fallthru
      _
    // Predicated region
    $region18: #{tpu_custom_call.1} parent=1 // pred_check
      _
    $region19: #{tpu_custom_call.1} parent=1 // pred_check_branch
      %56 = sbr.rel (0) target = $region21
    $region20: #{tpu_custom_call.1} parent=1 // pred_region
      _
    $region21: #{tpu_custom_call.1} parent=1 // pred_fallthru
      _
    // Predicated region
    $region22: #{tpu_custom_call.1} parent=1 // pred_check
      _
    $region23: #{tpu_custom_call.1} parent=1 // pred_check_branch
      %58 = sbr.rel (0) target = $region25
    $region24: #{tpu_custom_call.1} parent=1 // pred_region
      %60 = vsyncadd [#allocation11], 0
      %s61 = sshll.u32 %s5, 4
      %s62 = int_to_ptr.hbm [resolvable:$true] %s61
      %s63 = sshll.u32 [#allocation10], 4
      %s64 = int_to_ptr.vmem [resolvable:$true] %s63
      %69 = dma.hbm_to_vmem [thread:$0]  %s62, 1024, %s64, [#allocation11], 64, 64, 4
    $region25: #{tpu_custom_call.1} parent=1 // pred_fallthru
      _
    // Predicated region
    $region26: #{tpu_custom_call.1} parent=1 // pred_check
      _
    $region27: #{tpu_custom_call.1} parent=1 // pred_check_branch
      %71 = sbr.rel (0) target = $region29
    $region28: #{tpu_custom_call.1} parent=1 // pred_region
      _
    $region29: #{tpu_custom_call.1} parent=1 // pred_fallthru
      _
    // Predicated region
    $region30: #{tpu_custom_call.1} parent=1 // pred_check
      _
    $region31: #{tpu_custom_call.1} parent=1 // pred_check_branch
      %73 = sbr.rel (0) target = $region33
    $region32: #{tpu_custom_call.1} parent=1 // pred_region
      %75 = dma.done [#allocation5], 256
    $region33: #{tpu_custom_call.1} parent=1 // pred_fallthru
      _
    // Predicated region
    $region34: #{tpu_custom_call.1} parent=1 // pred_check
      _
    $region35: #{tpu_custom_call.1} parent=1 // pred_check_branch
      %77 = sbr.rel (0) target = $region37
    $region36: #{tpu_custom_call.1} parent=1 // pred_region
      %79 = dma.done [#allocation8], 16
    $region37: #{tpu_custom_call.1} parent=1 // pred_fallthru
      _
    // Predicated region
    $region38: #{tpu_custom_call.1} parent=1 // pred_check
      _
    $region39: #{tpu_custom_call.1} parent=1 // pred_check_branch
      %81 = sbr.rel (0) target = $region41
    $region40: #{tpu_custom_call.1} parent=1 // pred_region
      %83 = dma.done [#allocation8], 1024
    $region41: #{tpu_custom_call.1} parent=1 // pred_fallthru
      _
    // Predicated region
    $region42: #{tpu_custom_call.1} parent=1 // pred_check
      _
    $region43: #{tpu_custom_call.1} parent=1 // pred_check_branch
      %85 = sbr.rel (0) target = $region45
    $region44: #{tpu_custom_call.1} parent=1 // pred_region
      %87 = dma.done [#allocation11], 1024
    $region45: #{tpu_custom_call.1} parent=1 // pred_fallthru
      _
    %p88 = scmp.eq.s32.totalorder 0, 0
    // Predicated region
    $region46: #{tpu_custom_call.1} parent=1 // pred_check
      %p89 = pneg %p88
    $region47: #{tpu_custom_call.1} parent=1 // pred_check_branch
      %91 = sbr.rel (%p89) target = $region49
    $region48: #{tpu_custom_call.1} parent=1 // pred_region
      %v92 = vld [vmem:[#allocation4] sm:$0xff]
      %v93 = vld [vmem:[#allocation4 + $0x8] sm:$0xff]
      %94 = vadd.xlane.f32.xlu0 %v92
      %v95 = vpop.xlane.xlu0 %94
      %96 = vadd.xlane.f32.xlu0 %v93
      %v97 = vpop.xlane.xlu0 %96
      %v98 = vmul.f32 %v95, 0.03125
      %v99 = vmul.f32 %v97, 0.03125
      %v100 = vsub.f32 %v92, %v98
      %v101 = vsub.f32 %v93, %v99
      %v102 = vmul.f32 %v100, %v100
      %v103 = vmul.f32 %v101, %v101
      %104 = vadd.xlane.f32.xlu0 %v102
      %v105 = vpop.xlane.xlu0 %104
      %106 = vadd.xlane.f32.xlu0 %v103
      %v107 = vpop.xlane.xlu0 %106
      %v108 = vmul.f32 %v98, 96.0
      %v109 = vmul.f32 %v99, 96.0
      %v110 = vmul.f32 %v108, %v98
      %v111 = vmul.f32 %v109, %v99
      %v112 = vsub.f32 %v105, %v110
      %v113 = vsub.f32 %v107, %v111
      %v114 = vmul.f32 %v112, 0.03125
      %v115 = vmul.f32 %v113, 0.03125
      %v116 = vadd.f32 %v114, 1e-05
      %v117 = vadd.f32 %v115, 1e-05
      %v118 = vrsqrt.pop %v116
      %v119 = vmul.f32 %v118, %v116
      %v120 = vmul.f32 %v119, %v118
      %v121 = vmul.f32 0.5, %v120
      %v122 = vsub.f32 1.5, %v121
      %v123 = vmul.f32 %v118, %v122
      %vm124 = vweird.f32 %v116
      %vm125 = vweird.f32 %v118
      %vm126 = vmor %vm124, %vm125
      %v127 = vsel %vm126, %v118, %v123
      %v128 = vrsqrt.pop %v117
      %v129 = vmul.f32 %v128, %v117
      %v130 = vmul.f32 %v129, %v128
      %v131 = vmul.f32 0.5, %v130
      %v132 = vsub.f32 1.5, %v131
      %v133 = vmul.f32 %v128, %v132
      %vm134 = vweird.f32 %v117
      %vm135 = vweird.f32 %v128
      %vm136 = vmor %vm134, %vm135
      %v137 = vsel %vm136, %v128, %v133
      %v138 = vmul.f32 %v100, %v127
      %v139 = vmul.f32 %v101, %v137
      %v140 = vld [vmem:[#allocation7] sm:$0x1]
      %v142 = vperm.slane %v140, 0
      %v144 = vmul.f32 %v138, %v142
      %v145 = vmul.f32 %v139, %v142
      %v146 = vld [vmem:[%s2] sm:$0x1]
      %v148 = vperm.slane %v146, 0
      %v150 = vadd.f32 %v144, %v148
      %v151 = vadd.f32 %v145, %v148
      %v152 = vpack.c.bf16 %v150, %v150
      %v153 = vpack.c.bf16 %v151, %v151
      %154 = vst [vmem:[#allocation2] sm:$0xf] %v152
      %155 = vst [vmem:[#allocation2 + $0x4] sm:$0xf] %v153
      %156 = vst [vmem:[#allocation3] sm:$0xff] 0.0
      %157 = vst [vmem:[#allocation3 + $0x8] sm:$0xff] 0.0
    $region49: #{tpu_custom_call.1} parent=1 // pred_fallthru
      _
    %v158 = vld [vmem:[#allocation2] sm:$0xf]
    %v159 = vld [vmem:[#allocation2 + $0x4] sm:$0xf]
    %v160 = vld [vmem:[#allocation9] sm:$0xf]
    %v161 = vld [vmem:[#allocation9 + $0x4] sm:$0xf]
    %v162 = vld [vmem:[#allocation9 + $0x8] sm:$0xf]
    %v163 = vld [vmem:[#allocation9 + $0xc] sm:$0xf]
    %v164 = vld [vmem:[#allocation9 + $0x10] sm:$0xf]
    %v165 = vld [vmem:[#allocation9 + $0x14] sm:$0xf]
    %v166 = vld [vmem:[#allocation9 + $0x18] sm:$0xf]
    %v167 = vld [vmem:[#allocation9 + $0x1c] sm:$0xf]
    %v168 = vld [vmem:[#allocation9 + $0x20] sm:$0xf]
    %v169 = vld [vmem:[#allocation9 + $0x24] sm:$0xf]
    %v170 = vld [vmem:[#allocation9 + $0x28] sm:$0xf]
    %v171 = vld [vmem:[#allocation9 + $0x2c] sm:$0xf]
    %v172 = vld [vmem:[#allocation9 + $0x30] sm:$0xf]
    %v173 = vld [vmem:[#allocation9 + $0x34] sm:$0xf]
    %v174 = vld [vmem:[#allocation9 + $0x38] sm:$0xf]
    %v175 = vld [vmem:[#allocation9 + $0x3c] sm:$0xf]
    %v176 = vld [vmem:[%s4] sm:$0x1]
    %v178 = vperm.slane %v176, 0
    %v182 = vunpack.c.l.b16 %v158
    %v183 = vunpack.c.l.b16 %v159
    %v184 = vpack.c.b16 %v183, %v182
    %v202 = vunpack.c.l.b16 %v160
    %v203 = vunpack.c.l.b16 %v161
    %v204 = vunpack.c.l.b16 %v162
    %v205 = vunpack.c.l.b16 %v163
    %v206 = vunpack.c.l.b16 %v164
    %v207 = vunpack.c.l.b16 %v165
    %v208 = vunpack.c.l.b16 %v166
    %v209 = vunpack.c.l.b16 %v167
    %v210 = vunpack.c.l.b16 %v168
    %v211 = vunpack.c.l.b16 %v169
    %v212 = vunpack.c.l.b16 %v170
    %v213 = vunpack.c.l.b16 %v171
    %v214 = vunpack.c.l.b16 %v172
    %v215 = vunpack.c.l.b16 %v173
    %v216 = vunpack.c.l.b16 %v174
    %v217 = vunpack.c.l.b16 %v175
    %v218 = vpack.c.b16 %v203, %v202
    %v219 = vpack.c.b16 %v205, %v204
    %v220 = vpack.c.b16 %v207, %v206
    %v221 = vpack.c.b16 %v209, %v208
    %v222 = vpack.c.b16 %v211, %v210
    %v223 = vpack.c.b16 %v213, %v212
    %v224 = vpack.c.b16 %v215, %v214
    %v225 = vpack.c.b16 %v217, %v216
    %234 = vmatpush.bf16.msra.mxu0 %v225
    %235 = vmatpush.bf16.msra.mxu0 %v224
    %236 = vmatpush.bf16.msra.mxu0 %v223
    %237 = vmatpush.bf16.msra.mxu0 %v222
    %238 = vmatpush.bf16.msra.mxu0 %v221
    %239 = vmatpush.bf16.msra.mxu0 %v220
    %240 = vmatpush.bf16.msra.mxu0 %v219
    %241 = vmatpush.bf16.msra.mxu0 %v218
    %242 = vmatmul.bf16.gmra.mxu0 %v184
    %v243 = vpop.f32.mrf.mxu0
    %v244 = vadd.f32 %v178, %v243
    %v245 = vpop.f32.mrf.mxu0
    %v246 = vadd.f32 %v178, %v245
    %247 = vdwg.mxu0
    %v248 = vmul.f32 %v244, 0.5
    %v249 = vmul.f32 %v246, 0.5
    %v250 = vmul.f32 %v244, 0.044715
    %v251 = vmul.f32 %v246, 0.044715
    %v252 = vmul.f32 %v250, %v244
    %v253 = vmul.f32 %v251, %v246
    %v254 = vmul.f32 %v252, %v244
    %v255 = vmul.f32 %v253, %v246
    %v256 = vadd.f32 %v244, %v254
    %v257 = vadd.f32 %v246, %v255
    %v258 = vmul.f32 %v256, 0.7978846
    %v259 = vmul.f32 %v257, 0.7978846
    %v260 = vtanh.pop %v258
    %v261 = vtanh.pop %v259
    %v262 = vadd.f32 %v260, 1.0
    %v263 = vadd.f32 %v261, 1.0
    %v264 = vmul.f32 %v248, %v262
    %v265 = vmul.f32 %v249, %v263
    %v266 = vld [vmem:[#allocation3] sm:$0xff]
    %v267 = vld [vmem:[#allocation3 + $0x8] sm:$0xff]
    %v268 = vpack.c.bf16 %v265, %v264
    %v269 = vld [vmem:[#allocation10] sm:$0xf]
    %v270 = vld [vmem:[#allocation10 + $0x4] sm:$0xf]
    %v271 = vld [vmem:[#allocation10 + $0x8] sm:$0xf]
    %v272 = vld [vmem:[#allocation10 + $0xc] sm:$0xf]
    %v273 = vld [vmem:[#allocation10 + $0x10] sm:$0xf]
    %v274 = vld [vmem:[#allocation10 + $0x14] sm:$0xf]
    %v275 = vld [vmem:[#allocation10 + $0x18] sm:$0xf]
    %v276 = vld [vmem:[#allocation10 + $0x1c] sm:$0xf]
    %v277 = vld [vmem:[#allocation10 + $0x20] sm:$0xf]
    %v278 = vld [vmem:[#allocation10 + $0x24] sm:$0xf]
    %v279 = vld [vmem:[#allocation10 + $0x28] sm:$0xf]
    %v280 = vld [vmem:[#allocation10 + $0x2c] sm:$0xf]
    %v281 = vld [vmem:[#allocation10 + $0x30] sm:$0xf]
    %v282 = vld [vmem:[#allocation10 + $0x34] sm:$0xf]
    %v283 = vld [vmem:[#allocation10 + $0x38] sm:$0xf]
    %v284 = vld [vmem:[#allocation10 + $0x3c] sm:$0xf]
    %v301 = vunpack.c.l.b16 %v269
    %v302 = vunpack.c.l.b16 %v270
    %v303 = vunpack.c.l.b16 %v271
    %v304 = vunpack.c.l.b16 %v272
    %v305 = vunpack.c.l.b16 %v273
    %v306 = vunpack.c.l.b16 %v274
    %v307 = vunpack.c.l.b16 %v275
    %v308 = vunpack.c.l.b16 %v276
    %v309 = vunpack.c.l.b16 %v277
    %v310 = vunpack.c.l.b16 %v278
    %v311 = vunpack.c.l.b16 %v279
    %v312 = vunpack.c.l.b16 %v280
    %v313 = vunpack.c.l.b16 %v281
    %v314 = vunpack.c.l.b16 %v282
    %v315 = vunpack.c.l.b16 %v283
    %v316 = vunpack.c.l.b16 %v284
    %v317 = vpack.c.b16 %v302, %v301
    %v318 = vpack.c.b16 %v304, %v303
    %v319 = vpack.c.b16 %v306, %v305
    %v320 = vpack.c.b16 %v308, %v307
    %v321 = vpack.c.b16 %v310, %v309
    %v322 = vpack.c.b16 %v312, %v311
    %v323 = vpack.c.b16 %v314, %v313
    %v324 = vpack.c.b16 %v316, %v315
    %333 = vmatpush.bf16.msra.mxu0 %v324
    %334 = vmatpush.bf16.msra.mxu0 %v323
    %335 = vmatpush.bf16.msra.mxu0 %v322
    %336 = vmatpush.bf16.msra.mxu0 %v321
    %337 = vmatpush.bf16.msra.mxu0 %v320
    %338 = vmatpush.bf16.msra.mxu0 %v319
    %339 = vmatpush.bf16.msra.mxu0 %v318
    %340 = vmatpush.bf16.msra.mxu0 %v317
    %341 = vmatmul.bf16.gmra.mxu0 %v268
    %v342 = vpop.f32.mrf.mxu0
    %v343 = vadd.f32 0.0, %v342
    %v344 = vpop.f32.mrf.mxu0
    %v345 = vadd.f32 0.0, %v344
    %346 = vdwg.mxu0
    %v347 = vadd.f32 %v266, %v343
    %v348 = vadd.f32 %v267, %v345
    %349 = vst [vmem:[#allocation3] sm:$0xff] %v347
    %350 = vst [vmem:[#allocation3 + $0x8] sm:$0xff] %v348
    // Predicated region
    $region50: #{tpu_custom_call.1} parent=1 // pred_check
      %p351 = pneg %p88
    $region51: #{tpu_custom_call.1} parent=1 // pred_check_branch
      %353 = sbr.rel (%p351) target = $region53
    $region52: #{tpu_custom_call.1} parent=1 // pred_region
      %v354 = vld [vmem:[#allocation3] sm:$0xff]
      %v355 = vld [vmem:[#allocation3 + $0x8] sm:$0xff]
      %v356 = vld [vmem:[%s6] sm:$0x1]
      %v358 = vperm.slane %v356, 0
      %v360 = vadd.f32 %v354, %v358
      %v361 = vadd.f32 %v355, %v358
      %362 = vst [vmem:[#allocation12] sm:$0xff] %v360
      %363 = vst [vmem:[#allocation12 + $0x8] sm:$0xff] %v361
    $region53: #{tpu_custom_call.1} parent=1 // pred_fallthru
      _
    // Predicated region
    $region54: #{tpu_custom_call.1} parent=1 // pred_check
      _
    $region55: #{tpu_custom_call.1} parent=1 // pred_check_branch
      %365 = sbr.rel (0) target = $region57
    $region56: #{tpu_custom_call.1} parent=1 // pred_region
      %367 = vsyncadd [#allocation6], 0
      %s368 = sshll.u32 [#allocation12], 4
      %s369 = int_to_ptr.vmem [resolvable:$true] %s368
      %s370 = sshll.u32 %s7, 4
      %s371 = int_to_ptr.hbm [resolvable:$true] %s370
      %376 = dma.vmem_to_hbm [thread:$0]  %s369, 256, %s371, [#allocation6], 128, 128, 8
    $region57: #{tpu_custom_call.1} parent=1 // pred_fallthru
      _
    // Predicated region
    $region58: #{tpu_custom_call.1} parent=1 // pred_check
      _
    $region59: #{tpu_custom_call.1} parent=1 // pred_check_branch
      %378 = sbr.rel (0) target = $region61
    $region60: #{tpu_custom_call.1} parent=1 // pred_region
      %380 = dma.done [#allocation6], 256
    $region61: #{tpu_custom_call.1} parent=1 // pred_fallthru
      _
    %381 = vsyncpa [#allocation5], 1
    %382 = vsyncpa [#allocation8], 1
    %383 = vsyncpa [#allocation11], 1
    %384 = vsyncpa [#allocation6], 1

</llo_original>
